<compile_context>
chip_gen: v6e
topology: v6e:2x2x1
jax: 0.10.0
libtpu: 0.0.40
codegen_flags: <defaults>
</compile_context>

<pallas_src>
import functools

import jax
import jax.numpy as jnp
from jax.experimental import pallas as pl
from jax.experimental.pallas import tpu as pltpu


def _round_up(a, m):
    return ((a + m - 1) // m) * m


def qnet_kernel(x_ref, w1_ref, b1_ref, w2_ref, b2_ref, o_ref):
    # hidden = relu(x @ W1 + b1), f32 accumulation on the MXU.
    h = jnp.dot(x_ref[...], w1_ref[...], preferred_element_type=jnp.float32)
    h = jnp.maximum(h + b1_ref[0:1, :], 0.0)          # bias + ReLU on the VPU (f32)
    # out = hidden @ W2 + b2 (cast hidden to the weight dtype for the MXU).
    y = jnp.dot(h.astype(w2_ref.dtype), w2_ref[...],
                preferred_element_type=jnp.float32)
    o_ref[...] = (y + b2_ref[0:1, :]).astype(o_ref.dtype)


def prepare_params(w1, b1, w2, b2, *, compute_dtype=jnp.float32):
    """Pad / cast parameters once (reuse across many forward calls).

    w1 : (in_features, hidden)   b1 : (1, hidden) or (hidden,)
    w2 : (hidden, out_features)  b2 : (1, out_features) or (out_features,)
    """
    in_size, hidden = w1.shape
    out_size = w2.shape[1]
    Hp = _round_up(hidden, 128)      # lane-dense hidden
    Op = _round_up(out_size, 128)    # lane-dense output store

    w1p = jnp.zeros((in_size, Hp), compute_dtype).at[:, :hidden].set(
        w1.astype(compute_dtype))
    w2p = jnp.zeros((Hp, Op), compute_dtype).at[:hidden, :out_size].set(
        w2.astype(compute_dtype))
    b1p = jnp.zeros((8, Hp), jnp.float32).at[:, :hidden].set(
        jnp.broadcast_to(jnp.reshape(b1, (1, hidden)), (8, hidden)))
    b2p = jnp.zeros((8, Op), jnp.float32).at[:, :out_size].set(
        jnp.broadcast_to(jnp.reshape(b2, (1, out_size)), (8, out_size)))
    return (w1p, b1p, w2p, b2p), out_size


@functools.partial(jax.jit, static_argnames=("out_size", "tb", "compute_dtype"))
def _forward_padded(x, w1p, b1p, w2p, b2p, *, out_size, tb, compute_dtype):
    B, in_size = x.shape
    Hp = w1p.shape[1]
    Op = w2p.shape[1]

    # Batch tiling: TB is a multiple of 8 (f32 sublane); pad batch so every
    # grid step is a full, aligned tile.
    TB = min(tb, _round_up(B, 8))
    Bp = _round_up(B, TB)
    xp = jnp.zeros((Bp, in_size), compute_dtype).at[:B, :].set(
        x.astype(compute_dtype))

    flops = 2 * Bp * in_size * Hp + 2 * Bp * Hp * Op
    bytes_accessed = (xp.size * xp.dtype.itemsize
                      + w1p.size * w1p.dtype.itemsize
                      + w2p.size * w2p.dtype.itemsize
                      + b1p.size * 4 + b2p.size * 4
                      + Bp * Op * 4)

    out_padded = pl.pallas_call(
        qnet_kernel,
        out_shape=jax.ShapeDtypeStruct((Bp, Op), jnp.float32),
        grid_spec=pltpu.PrefetchScalarGridSpec(
            num_scalar_prefetch=0,
            grid=(Bp // TB,),
            in_specs=[
                pl.BlockSpec((TB, in_size), lambda i: (i, 0)),   # x tile (pipelined)
                pl.BlockSpec((in_size, Hp), lambda i: (0, 0)),   # W1 resident
                pl.BlockSpec((8, Hp),       lambda i: (0, 0)),   # b1 resident
                pl.BlockSpec((Hp, Op),      lambda i: (0, 0)),   # W2 resident
                pl.BlockSpec((8, Op),       lambda i: (0, 0)),   # b2 resident
            ],
            out_specs=pl.BlockSpec((TB, Op), lambda i: (i, 0)),
        ),
        compiler_params=pltpu.CompilerParams(
            dimension_semantics=("parallel",)),
        cost_estimate=pl.CostEstimate(flops=flops, transcendentals=0,
                                      bytes_accessed=bytes_accessed),
    )(xp, w1p, b1p, w2p, b2p)

    return out_padded[:B, :out_size]


def linear_qnet_forward(x, w1, b1, w2, b2, *, tb=256, compute_dtype=jnp.float32):
    """One-shot forward (pads params internally).  For repeated use, call
    prepare_params() once and _forward_padded() per step."""
    (w1p, b1p, w2p, b2p), out_size = prepare_params(
        w1, b1, w2, b2, compute_dtype=compute_dtype)
    return _forward_padded(x, w1p, b1p, w2p, b2p,
                           out_size=out_size, tb=tb, compute_dtype=compute_dtype)


def init_params(key, input_size, hidden_size, output_size):
    """PyTorch nn.Linear default init: U(-1/sqrt(fan_in), 1/sqrt(fan_in))."""
    k1, k2, k3, k4 = jax.random.split(key, 4)
    bound1 = 1.0 / jnp.sqrt(jnp.float32(input_size))
    bound2 = 1.0 / jnp.sqrt(jnp.float32(hidden_size))
    # stored pre-transposed: (in, out)
    w1 = jax.random.uniform(k1, (input_size, hidden_size), jnp.float32, -bound1, bound1)
    b1 = jax.random.uniform(k2, (1, hidden_size), jnp.float32, -bound1, bound1)
    w2 = jax.random.uniform(k3, (hidden_size, output_size), jnp.float32, -bound2, bound2)
    b2 = jax.random.uniform(k4, (1, output_size), jnp.float32, -bound2, bound2)
    return w1, b1, w2, b2


# TODO(synk): Linear_QNet.save()/load() are file I/O, not part of the forward
# pass, and are intentionally not translated to Pallas.

if __name__ == "__main__":
    # Typical snake-game QNet dims: input_size=11, hidden=32, output=3.
    input_size, hidden_size, output_size = 11, 32, 3

    key = jax.random.PRNGKey(0)
    kx, kp = jax.random.split(key)
    w1, b1, w2, b2 = init_params(kp, input_size, hidden_size, output_size)

    # 1) Small-batch correctness check (f32 compute path), batch = 2.
    x_small = jax.random.normal(kx, (2, input_size), jnp.float32)
    out_small = jax.block_until_ready(
        linear_qnet_forward(x_small, w1, b1, w2, b2))
    ref_small = jnp.maximum(x_small @ w1 + b1, 0.0) @ w2 + b2
    assert out_small.shape == (2, output_size)
    assert jnp.allclose(out_small, ref_small, atol=1e-5, rtol=1e-5)

    # 2) Larger batch exercising the batch grid (2 tiles of 256), resident
    #    weights, params prepared once, bf16 matmul inputs + f32 accumulation.
    (w1p, b1p, w2p, b2p), out_size = prepare_params(
        w1, b1, w2, b2, compute_dtype=jnp.bfloat16)
    x_big = jax.random.normal(kx, (512, input_size), jnp.float32)
    out_big = jax.block_until_ready(
        _forward_padded(x_big, w1p, b1p, w2p, b2p,
                        out_size=out_size, tb=256, compute_dtype=jnp.bfloat16))
    ref_big = jnp.maximum(x_big @ w1 + b1, 0.0) @ w2 + b2
    assert out_big.shape == (512, output_size)
    assert jnp.allclose(out_big, ref_big, atol=5e-2, rtol=5e-2)

    print("KERNEL_OK")
</pallas_src>

<mosaic_0001>
module attributes {stable_mosaic.version = 11 : i64} {
  func.func @qnet_kernel(%arg0: i32, %arg1: memref<8x11xf32, #tpu.memory_space<vmem>>, %arg2: memref<11x128xf32, #tpu.memory_space<vmem>>, %arg3: memref<8x128xf32, #tpu.memory_space<vmem>>, %arg4: memref<128x128xf32, #tpu.memory_space<vmem>>, %arg5: memref<8x128xf32, #tpu.memory_space<vmem>>, %arg6: memref<8x128xf32, #tpu.memory_space<vmem>>) attributes {dimension_semantics = [#tpu.dimension_semantics<parallel>], iteration_bounds = array<i64: 1>, scalar_prefetch = 0 : i64, scratch_operands = 0 : i64, tpu.core_type = #tpu.core_type<tc>, window_params = [{transform_indices = @transform_0, window_bounds = array<i64: 8, 11>}, {pipeline_mode = #tpu.pipeline_mode<synchronous>, transform_indices = @transform_1, window_bounds = array<i64: 11, 128>}, {pipeline_mode = #tpu.pipeline_mode<synchronous>, transform_indices = @transform_2, window_bounds = array<i64: 8, 128>}, {pipeline_mode = #tpu.pipeline_mode<synchronous>, transform_indices = @transform_3, window_bounds = array<i64: 128, 128>}, {pipeline_mode = #tpu.pipeline_mode<synchronous>, transform_indices = @transform_4, window_bounds = array<i64: 8, 128>}, {transform_indices = @transform_5, window_bounds = array<i64: 8, 128>}]} {
    %c0 = arith.constant 0 : index
    %c0_0 = arith.constant 0 : index
    %0 = vector.load %arg1[%c0, %c0_0] : memref<8x11xf32, #tpu.memory_space<vmem>>, vector<8x11xf32>
    %c0_1 = arith.constant 0 : index
    %c0_2 = arith.constant 0 : index
    %1 = vector.load %arg2[%c0_1, %c0_2] : memref<11x128xf32, #tpu.memory_space<vmem>>, vector<11x128xf32>
    %cst = arith.constant dense<0.000000e+00> : vector<8x128xf32>
    %2 = tpu.matmul %0, %1, %cst {dimension_numbers = #tpu.dot_dimension_numbers<[1], [0], [0], [1], [0, 0, 1, 1], [], []>} : vector<8x11xf32>, vector<11x128xf32>, vector<8x128xf32> -> vector<8x128xf32>
    %c0_3 = arith.constant 0 : index
    %c0_4 = arith.constant 0 : index
    %3 = vector.load %arg3[%c0_3, %c0_4] : memref<8x128xf32, #tpu.memory_space<vmem>>, vector<1x128xf32>
    %4 = vector.broadcast %3 : vector<1x128xf32> to vector<8x128xf32>
    %5 = arith.addf %2, %4 : vector<8x128xf32>
    %cst_5 = arith.constant 0.000000e+00 : f32
    %6 = vector.broadcast %cst_5 : f32 to vector<8x128xf32>
    %7 = arith.maximumf %5, %6 : vector<8x128xf32>
    %c0_6 = arith.constant 0 : index
    %c0_7 = arith.constant 0 : index
    %8 = vector.load %arg4[%c0_6, %c0_7] : memref<128x128xf32, #tpu.memory_space<vmem>>, vector<128x128xf32>
    %cst_8 = arith.constant dense<0.000000e+00> : vector<8x128xf32>
    %9 = tpu.matmul %7, %8, %cst_8 {dimension_numbers = #tpu.dot_dimension_numbers<[1], [0], [0], [1], [0, 0, 1, 1], [], []>} : vector<8x128xf32>, vector<128x128xf32>, vector<8x128xf32> -> vector<8x128xf32>
    %c0_9 = arith.constant 0 : index
    %c0_10 = arith.constant 0 : index
    %10 = vector.load %arg5[%c0_9, %c0_10] : memref<8x128xf32, #tpu.memory_space<vmem>>, vector<1x128xf32>
    %11 = vector.broadcast %10 : vector<1x128xf32> to vector<8x128xf32>
    %12 = arith.addf %9, %11 : vector<8x128xf32>
    %c0_11 = arith.constant 0 : index
    %c0_12 = arith.constant 0 : index
    %13 = vector.load %arg6[%c0_11, %c0_12] : memref<8x128xf32, #tpu.memory_space<vmem>>, vector<8x128xf32>
    tpu.vector_store %arg6[%c0_11, %c0_12], %12 {strides = array<i32>} : memref<8x128xf32, #tpu.memory_space<vmem>>, vector<8x128xf32>,
    return
  }
  func.func @transform_0(%arg0: i32) -> (i32, i32) {
    %c0_i32 = arith.constant 0 : i32
    %c0_i32_0 = arith.constant 0 : i32
    return %arg0, %c0_i32 : i32, i32
  }
  func.func @transform_1(%arg0: i32) -> (i32, i32) {
    %c0_i32 = arith.constant 0 : i32
    %c0_i32_0 = arith.constant 0 : i32
    %c0_i32_1 = arith.constant 0 : i32
    return %c0_i32, %c0_i32_0 : i32, i32
  }
  func.func @transform_2(%arg0: i32) -> (i32, i32) {
    %c0_i32 = arith.constant 0 : i32
    %c0_i32_0 = arith.constant 0 : i32
    %c0_i32_1 = arith.constant 0 : i32
    return %c0_i32, %c0_i32_0 : i32, i32
  }
  func.func @transform_3(%arg0: i32) -> (i32, i32) {
    %c0_i32 = arith.constant 0 : i32
    %c0_i32_0 = arith.constant 0 : i32
    %c0_i32_1 = arith.constant 0 : i32
    return %c0_i32, %c0_i32_0 : i32, i32
  }
  func.func @transform_4(%arg0: i32) -> (i32, i32) {
    %c0_i32 = arith.constant 0 : i32
    %c0_i32_0 = arith.constant 0 : i32
    %c0_i32_1 = arith.constant 0 : i32
    return %c0_i32, %c0_i32_0 : i32, i32
  }
  func.func @transform_5(%arg0: i32) -> (i32, i32) {
    %c0_i32 = arith.constant 0 : i32
    %c0_i32_0 = arith.constant 0 : i32
    return %arg0, %c0_i32 : i32, i32
  }
}

</mosaic_0001>

<llo_original>
// kernel: _forward_padded.1
$region0: #{_forward_padded.1}
  #allocation0 [shape = 'u32[]', space=smem, size = 0x4, offset = 0x4, fixed_abs, tag = 'smem constant byte address 0x4 - core index']
  #allocation1 [shape = 'u32[144,128]{1,0:T(1,128)}', space=vmem, size = 0x12000, scoped, tag = 'internal scratch']
  %s0 = inlined_call_operand.vmem [shape: f32[8,11], index: 0, kind: input, shape index: {}]
  %s1 = inlined_call_operand.hbm [shape: f32[11,128], index: 1, kind: input, shape index: {}]
  %s2 = inlined_call_operand.vmem [shape: f32[8,128], index: 2, kind: input, shape index: {}]
  %s3 = inlined_call_operand.hbm [shape: f32[128,128], index: 3, kind: input, shape index: {}]
  %s4 = inlined_call_operand.vmem [shape: f32[8,128], index: 4, kind: input, shape index: {}]
  %s5 = inlined_call_operand.vmem [shape: f32[8,128], index: 5, kind: output, shape index: {}]
  %s6 = sld [smem:[#allocation0]]
  $region38: #{_forward_padded.1} parent=0
    _
  %s8 = ssub.s32 1, %s6
  %s9 = scalar_select 0, %s8, %s6
  $region1: #{_forward_padded.1} parent=0
    #allocation2 [shape = 'u8[8192]{0}', space=vmem, size = 0x2000, scoped, tag = 'input window, operand 1, single buffered']
    #allocation3 [shape = 's32[1]{0}', space=sflag, size = 0x4, scoped, tag = 'scoped memory for _forward_padded.1']
    #allocation4 [shape = 'u8[65536]{0}', space=vmem, size = 0x10000, scoped, tag = 'input window, operand 3, single buffered']
    #allocation5 [shape = 's32[1]{0}', space=sflag, size = 0x4, scoped, tag = 'scoped memory for _forward_padded.1']
    %10 = vsyncpa [#allocation3], 0
    %11 = vsyncpa [#allocation5], 0
    // Predicated region
    $region2: #{_forward_padded.1} parent=1 // pred_check
      _
    $region3: #{_forward_padded.1} parent=1 // pred_check_branch
      %13 = sbr.rel (0) target = $region5
    $region4: #{_forward_padded.1} parent=1 // pred_region
      _
    $region5: #{_forward_padded.1} parent=1 // pred_fallthru
      _
    // Predicated region
    $region6: #{_forward_padded.1} parent=1 // pred_check
      _
    $region7: #{_forward_padded.1} parent=1 // pred_check_branch
      %15 = sbr.rel (0) target = $region9
    $region8: #{_forward_padded.1} parent=1 // pred_region
      %s17 = ssub.s32 256, 256
      %18 = vsyncadd [#allocation3], %s17
      %s19 = sshll.u32 [#allocation2], 4
      %s20 = int_to_ptr.vmem [resolvable:$true] %s19
      %25 = dma.hbm_to_vmem [thread:$0]  %s1, 256, %s20, [#allocation3], 128, 128, 8
    $region9: #{_forward_padded.1} parent=1 // pred_fallthru
      _
    // Predicated region
    $region10: #{_forward_padded.1} parent=1 // pred_check
      _
    $region11: #{_forward_padded.1} parent=1 // pred_check_branch
      %27 = sbr.rel (0) target = $region13
    $region12: #{_forward_padded.1} parent=1 // pred_region
      _
    $region13: #{_forward_padded.1} parent=1 // pred_fallthru
      _
    // Predicated region
    $region14: #{_forward_padded.1} parent=1 // pred_check
      _
    $region15: #{_forward_padded.1} parent=1 // pred_check_branch
      %29 = sbr.rel (0) target = $region17
    $region16: #{_forward_padded.1} parent=1 // pred_region
      %s31 = ssub.s32 2048, 2048
      %32 = vsyncadd [#allocation5], %s31
      %s33 = sshll.u32 [#allocation4], 4
      %s34 = int_to_ptr.vmem [resolvable:$true] %s33
      %39 = dma.hbm_to_vmem [thread:$0]  %s3, 2048, %s34, [#allocation5], 128, 128, 8
    $region17: #{_forward_padded.1} parent=1 // pred_fallthru
      _
    // Predicated region
    $region18: #{_forward_padded.1} parent=1 // pred_check
      _
    $region19: #{_forward_padded.1} parent=1 // pred_check_branch
      %41 = sbr.rel (0) target = $region21
    $region20: #{_forward_padded.1} parent=1 // pred_region
      _
    $region21: #{_forward_padded.1} parent=1 // pred_fallthru
      _
    // Predicated region
    $region22: #{_forward_padded.1} parent=1 // pred_check
      _
    $region23: #{_forward_padded.1} parent=1 // pred_check_branch
      %43 = sbr.rel (0) target = $region25
    $region24: #{_forward_padded.1} parent=1 // pred_region
      %44 = dma.done [#allocation3], 256
    $region25: #{_forward_padded.1} parent=1 // pred_fallthru
      _
    // Predicated region
    $region26: #{_forward_padded.1} parent=1 // pred_check
      _
    $region27: #{_forward_padded.1} parent=1 // pred_check_branch
      %46 = sbr.rel (0) target = $region29
    $region28: #{_forward_padded.1} parent=1 // pred_region
      %47 = dma.done [#allocation5], 2048
    $region29: #{_forward_padded.1} parent=1 // pred_fallthru
      _
    %v48 = vld [vmem:[%s0] sm:$0xff]
    %v49 = vld [vmem:[#allocation2] sm:$0xff]
    %v50 = vld [vmem:[#allocation2 + $0x8] sm:$0x7]
    %v51 = vld [vmem:[%s2] sm:$0x1]
    %v52 = vlaneseq
    %v53 = vshrl.u32 %v52, 7
    %v54 = vsub.s32 0, %v53
    %v55 = vrot.slane %v51, %v54
    %vm56 = vcmask 89088
    %v58 = vsel %vm56, %v48, 0
    %vm60 = vcmask 1042432
    %v62 = vsel %vm60, %v50, 0
    %64 = vmatprep.subr.mxu0 0.0
    %65 = vmatpush1.msra.mxu0 0.0
    %66 = vmatprep.subr.mxu0 0.0
    %67 = vmatpush1.msra.mxu0 0.0
    %68 = vmatprep.subr.mxu0 0.0
    %69 = vmatpush1.msra.mxu0 0.0
    %70 = vmatprep.subr.mxu0 0.0
    %71 = vmatpush1.msra.mxu0 0.0
    %72 = vmatprep.subr.mxu0 0.0
    %73 = vmatpush1.msra.mxu0 0.0
    %74 = vmatprep.subr.mxu0 0.0
    %75 = vmatpush1.msra.mxu0 0.0
    %76 = vmatprep.subr.mxu0 0.0
    %77 = vmatpush1.msra.mxu0 0.0
    %78 = vmatprep.subr.mxu0 0.0
    %79 = vmatpush1.msra.mxu0 0.0
    %80 = vmatprep.subr.mxu0 0.0
    %81 = vmatpush1.msra.mxu0 0.0
    %82 = vmatprep.subr.mxu0 0.0
    %83 = vmatpush1.msra.mxu0 0.0
    %84 = vmatprep.subr.mxu0 0.0
    %85 = vmatpush1.msra.mxu0 0.0
    %86 = vmatprep.subr.mxu0 0.0
    %87 = vmatpush1.msra.mxu0 0.0
    %88 = vmatprep.subr.mxu0 0.0
    %89 = vmatpush1.msra.mxu0 0.0
    %90 = vmatprep.subr.mxu0 0.0
    %91 = vmatpush1.msra.mxu0 0.0
    %92 = vmatprep.subr.mxu0 0.0
    %93 = vmatpush1.msra.mxu0 %v62
    %94 = vmatprep.subr.mxu0 0.0
    %95 = vmatpush1.msra.mxu0 %v49
    %96 = vmatprep.subr.mxu0 0.0
    %97 = vmatpush2.msra.mxu0 0.0
    %98 = vmatprep.subr.mxu0 0.0
    %99 = vmatpush2.msra.mxu0 0.0
    %100 = vmatprep.subr.mxu0 0.0
    %101 = vmatpush2.msra.mxu0 0.0
    %102 = vmatprep.subr.mxu0 0.0
    %103 = vmatpush2.msra.mxu0 0.0
    %104 = vmatprep.subr.mxu0 0.0
    %105 = vmatpush2.msra.mxu0 0.0
    %106 = vmatprep.subr.mxu0 0.0
    %107 = vmatpush2.msra.mxu0 0.0
    %108 = vmatprep.subr.mxu0 0.0
    %109 = vmatpush2.msra.mxu0 0.0
    %110 = vmatprep.subr.mxu0 0.0
    %111 = vmatpush2.msra.mxu0 0.0
    %112 = vmatprep.subr.mxu0 0.0
    %113 = vmatpush2.msra.mxu0 0.0
    %114 = vmatprep.subr.mxu0 0.0
    %115 = vmatpush2.msra.mxu0 0.0
    %116 = vmatprep.subr.mxu0 0.0
    %117 = vmatpush2.msra.mxu0 0.0
    %118 = vmatprep.subr.mxu0 0.0
    %119 = vmatpush2.msra.mxu0 0.0
    %120 = vmatprep.subr.mxu0 0.0
    %121 = vmatpush2.msra.mxu0 0.0
    %122 = vmatprep.subr.mxu0 0.0
    %123 = vmatpush2.msra.mxu0 0.0
    %124 = vmatprep.subr.mxu0 0.0
    %125 = vmatpush2.msra.mxu0 0.0
    %126 = vmatprep.subr.mxu0 0.0
    %127 = vmatpush2.msra.mxu0 0.0
    %128 = vmatprep.mubr.f32.mxu0 0.0
    %129 = vmatmul.mubr.f32.gmra.mxu0 %v58
    %v130 = vpop.f32.mrf.mxu0
    %v131 = vadd.f32 %v55, %v130
    %v132 = vpop.f32.mrf.mxu0
    %133 = vdwg.mxu0
    %v134 = vmax.f32 %v131, 0.0
    %v135 = vld [vmem:[#allocation4] sm:$0xff]
    %v136 = vld [vmem:[#allocation4 + $0x8] sm:$0xff]
    %v137 = vld [vmem:[#allocation4 + $0x10] sm:$0xff]
    %v138 = vld [vmem:[#allocation4 + $0x18] sm:$0xff]
    %v139 = vld [vmem:[#allocation4 + $0x20] sm:$0xff]
    %v140 = vld [vmem:[#allocation4 + $0x28] sm:$0xff]
    %v141 = vld [vmem:[#allocation4 + $0x30] sm:$0xff]
    %v142 = vld [vmem:[#allocation4 + $0x38] sm:$0xff]
    %v143 = vld [vmem:[#allocation4 + $0x40] sm:$0xff]
    %v144 = vld [vmem:[#allocation4 + $0x48] sm:$0xff]
    %v145 = vld [vmem:[#allocation4 + $0x50] sm:$0xff]
    %v146 = vld [vmem:[#allocation4 + $0x58] sm:$0xff]
    %v147 = vld [vmem:[#allocation4 + $0x60] sm:$0xff]
    %v148 = vld [vmem:[#allocation4 + $0x68] sm:$0xff]
    %v149 = vld [vmem:[#allocation4 + $0x70] sm:$0xff]
    %v150 = vld [vmem:[#allocation4 + $0x78] sm:$0xff]
    %v151 = vld [vmem:[%s4] sm:$0x1]
    %v152 = vlaneseq
    %v153 = vshrl.u32 %v152, 7
    %v154 = vsub.s32 0, %v153
    %v155 = vrot.slane %v151, %v154
    %156 = vmatprep.subr.mxu0 0.0
    %157 = vmatpush1.msra.mxu0 %v150
    %158 = vmatprep.subr.mxu0 0.0
    %159 = vmatpush1.msra.mxu0 %v149
    %160 = vmatprep.subr.mxu0 0.0
    %161 = vmatpush1.msra.mxu0 %v148
    %162 = vmatprep.subr.mxu0 0.0
    %163 = vmatpush1.msra.mxu0 %v147
    %164 = vmatprep.subr.mxu0 0.0
    %165 = vmatpush1.msra.mxu0 %v146
    %166 = vmatprep.subr.mxu0 0.0
    %167 = vmatpush1.msra.mxu0 %v145
    %168 = vmatprep.subr.mxu0 0.0
    %169 = vmatpush1.msra.mxu0 %v144
    %170 = vmatprep.subr.mxu0 0.0
    %171 = vmatpush1.msra.mxu0 %v143
    %172 = vmatprep.subr.mxu0 0.0
    %173 = vmatpush1.msra.mxu0 %v142
    %174 = vmatprep.subr.mxu0 0.0
    %175 = vmatpush1.msra.mxu0 %v141
    %176 = vmatprep.subr.mxu0 0.0
    %177 = vmatpush1.msra.mxu0 %v140
    %178 = vmatprep.subr.mxu0 0.0
    %179 = vmatpush1.msra.mxu0 %v139
    %180 = vmatprep.subr.mxu0 0.0
    %181 = vmatpush1.msra.mxu0 %v138
    %182 = vmatprep.subr.mxu0 0.0
    %183 = vmatpush1.msra.mxu0 %v137
    %184 = vmatprep.subr.mxu0 0.0
    %185 = vmatpush1.msra.mxu0 %v136
    %186 = vmatprep.subr.mxu0 0.0
    %187 = vmatpush1.msra.mxu0 %v135
    %188 = vmatprep.subr.mxu0 0.0
    %189 = vmatpush2.msra.mxu0 0.0
    %190 = vmatprep.subr.mxu0 0.0
    %191 = vmatpush2.msra.mxu0 0.0
    %192 = vmatprep.subr.mxu0 0.0
    %193 = vmatpush2.msra.mxu0 0.0
    %194 = vmatprep.subr.mxu0 0.0
    %195 = vmatpush2.msra.mxu0 0.0
    %196 = vmatprep.subr.mxu0 0.0
    %197 = vmatpush2.msra.mxu0 0.0
    %198 = vmatprep.subr.mxu0 0.0
    %199 = vmatpush2.msra.mxu0 0.0
    %200 = vmatprep.subr.mxu0 0.0
    %201 = vmatpush2.msra.mxu0 0.0
    %202 = vmatprep.subr.mxu0 0.0
    %203 = vmatpush2.msra.mxu0 0.0
    %204 = vmatprep.subr.mxu0 0.0
    %205 = vmatpush2.msra.mxu0 0.0
    %206 = vmatprep.subr.mxu0 0.0
    %207 = vmatpush2.msra.mxu0 0.0
    %208 = vmatprep.subr.mxu0 0.0
    %209 = vmatpush2.msra.mxu0 0.0
    %210 = vmatprep.subr.mxu0 0.0
    %211 = vmatpush2.msra.mxu0 0.0
    %212 = vmatprep.subr.mxu0 0.0
    %213 = vmatpush2.msra.mxu0 0.0
    %214 = vmatprep.subr.mxu0 0.0
    %215 = vmatpush2.msra.mxu0 0.0
    %216 = vmatprep.subr.mxu0 0.0
    %217 = vmatpush2.msra.mxu0 0.0
    %218 = vmatprep.subr.mxu0 0.0
    %219 = vmatpush2.msra.mxu0 0.0
    %220 = vmatprep.mubr.f32.mxu0 0.0
    %221 = vmatmul.mubr.f32.gmra.mxu0 %v134
    %v222 = vpop.f32.mrf.mxu0
    %v223 = vadd.f32 %v155, %v222
    %v224 = vpop.f32.mrf.mxu0
    %225 = vdwg.mxu0
    %226 = vst [vmem:[%s5] sm:$0xff] %v223
    // Predicated region
    $region30: #{_forward_padded.1} parent=1 // pred_check
      _
    $region31: #{_forward_padded.1} parent=1 // pred_check_branch
      %228 = sbr.rel (0) target = $region33
    $region32: #{_forward_padded.1} parent=1 // pred_region
      _
    $region33: #{_forward_padded.1} parent=1 // pred_fallthru
      _
    // Predicated region
    $region34: #{_forward_padded.1} parent=1 // pred_check
      _
    $region35: #{_forward_padded.1} parent=1 // pred_check_branch
      %230 = sbr.rel (0) target = $region37
    $region36: #{_forward_padded.1} parent=1 // pred_region
      _
    $region37: #{_forward_padded.1} parent=1 // pred_fallthru
      _
    %231 = vsyncpa [#allocation3], 1
    %232 = vsyncpa [#allocation5], 1

</llo_original>
